<compile_context>
chip_gen: v7x
topology: tpu7x:2x2x1
jax: 0.10.0
libtpu: 0.0.40
codegen_flags: <defaults>
</compile_context>

<pallas_src>
import functools

import jax
import jax.numpy as jnp
from jax.experimental import pallas as pl
from jax.experimental.pallas import tpu as pltpu


def _refined_reciprocal(x):
    # EUP approximate reciprocal (runs on the otherwise-idle EUP slot) plus a
    # single Newton-Raphson refinement on the VALU for ~f32 accuracy.
    r = pl.reciprocal(x, approx=True)
    return r * (2.0 - x * r)


def _giou_cost_kernel(pred_ref, gt_ref, out_ref, *, weight):
    # pred_ref: (TN, 4)  -- pred box coords, queries on sublanes
    # gt_ref:   (4, TM)  -- gt box coords, gt boxes on lanes
    p = pred_ref[...]                       # (TN, 4)
    g = gt_ref[...]                         # (4, TM)

    # Narrow coordinate views: (TN,1) columns for pred, (1,TM) rows for gt.
    # Binary ops broadcast them implicitly to the (TN, TM) tile, so only the
    # few genuine full-tile temporaries (iw/ih/inter/union/enclose/...) are
    # live at once -> no vreg spill into the vst slot.
    px1, py1, px2, py2 = p[:, 0:1], p[:, 1:2], p[:, 2:3], p[:, 3:4]
    gx1, gy1, gx2, gy2 = g[0:1, :], g[1:2, :], g[2:3, :], g[3:4, :]

    # Per-box areas in narrow form (column / row), NOT on full tiles.
    area_p = (px2 - px1) * (py2 - py1)      # (TN, 1)
    area_g = (gx2 - gx1) * (gy2 - gy1)      # (1, TM)

    # Intersection (first full-tile values appear here).
    iw = jnp.maximum(jnp.minimum(px2, gx2) - jnp.maximum(px1, gx1), 0.0)
    ih = jnp.maximum(jnp.minimum(py2, gy2) - jnp.maximum(py1, gy1), 0.0)
    inter = iw * ih
    union = (area_p + area_g) - inter

    # Smallest enclosing box.  No >=0 clamps: for well-formed x1y1x2y2 boxes
    # (x2 >= x1, y2 >= y1) the enclosing extents are non-negative.
    ew = jnp.maximum(px2, gx2) - jnp.minimum(px1, gx1)
    eh = jnp.maximum(py2, gy2) - jnp.minimum(py1, gy1)
    enclose = ew * eh

    # giou = iou - (enclose - union)/enclose = inter/union + union/enclose - 1
    # cost = -giou * weight
    #      = weight * (1 - (inter*enclose + union*union) / (union*enclose))
    # Single fused reciprocal: one EUP op + one NR step instead of two divides.
    num = inter * enclose + union * union
    inv = _refined_reciprocal(union * enclose)
    out_ref[...] = (weight * (1.0 - num * inv)).astype(out_ref.dtype)


def giou_cost(pred_bboxes, gt_bboxes, weight=1.0, *,
              tn=256, tm=1024, out_dtype=jnp.float32):
    """Pairwise GIoU cost: -GIoU(pred, gt) * weight, shape (num_queries, num_gt)."""
    # NOTE: `weight` is baked into the kernel (recompiles per distinct value);
    # it is a module-init hyperparameter so this is normally a non-issue.
    n = pred_bboxes.shape[0]
    m = gt_bboxes.shape[0]
    if n == 0 or m == 0:
        return jnp.zeros((n, m), out_dtype)

    # Cap tile sizes to the (8,128)-rounded problem so small problems don't pay
    # for a huge padded tile, while big problems get large lane-dense tiles.
    # Default 256x1024 amortizes per-step overhead and stays inside v7x VMEM.
    tn = min(int(tn), pl.cdiv(n, 8) * 8)
    tm = min(int(tm), pl.cdiv(m, 128) * 128)
    npad = pl.cdiv(n, tn) * tn
    mpad = pl.cdiv(m, tm) * tm

    # Guarantee >= 2 grid steps along the (parallel) query axis when the whole
    # problem fits in one tile, so v7x can shard the work across both
    # TensorCores.  Negligible cost (~0.35us extra step) on 1-TC chips.
    if npad // tn == 1 and mpad // tm == 1 and n > 8:
        tn = max(8, pl.cdiv(pl.cdiv(n, 2), 8) * 8)
        npad = pl.cdiv(n, tn) * tn

    # Pad with dummy boxes [0, 0, 1, 1] so the fused denominator union*enclose
    # stays strictly positive in the pad region.
    dummy = jnp.array([0.0, 0.0, 1.0, 1.0], dtype=jnp.float32)
    pred_p = pred_bboxes.astype(jnp.float32)
    if npad > n:
        pred_p = jnp.concatenate(
            [pred_p, jnp.broadcast_to(dummy, (npad - n, 4))], axis=0)
    gt_p = gt_bboxes.astype(jnp.float32)
    if mpad > m:
        gt_p = jnp.concatenate(
            [gt_p, jnp.broadcast_to(dummy, (mpad - m, 4))], axis=0)
    gt_t = gt_p.T                                           # (4, Mp)

    grid = (npad // tn, mpad // tm)
    kernel = functools.partial(_giou_cost_kernel, weight=float(weight))

    out = pl.pallas_call(
        kernel,
        out_shape=jax.ShapeDtypeStruct((npad, mpad), out_dtype),
        grid_spec=pltpu.PrefetchScalarGridSpec(
            num_scalar_prefetch=0,
            grid=grid,
            in_specs=[pl.BlockSpec((tn, 4), lambda i, j: (i, 0)),
                      pl.BlockSpec((4, tm), lambda i, j: (0, j))],
            out_specs=pl.BlockSpec((tn, tm), lambda i, j: (i, j)),
        ),
        compiler_params=pltpu.CompilerParams(
            dimension_semantics=("parallel", "parallel"),
            vmem_limit_bytes=32 * 1024 * 1024),
    )(pred_p, gt_t)

    return out[:n, :m]


def _giou_cost_ref(pred, gt, weight=1.0):
    """Pure-JAX reference (matches torchvision generalized_box_iou)."""
    area1 = (pred[:, 2] - pred[:, 0]) * (pred[:, 3] - pred[:, 1])
    area2 = (gt[:, 2] - gt[:, 0]) * (gt[:, 3] - gt[:, 1])
    lt = jnp.maximum(pred[:, None, :2], gt[None, :, :2])
    rb = jnp.minimum(pred[:, None, 2:], gt[None, :, 2:])
    wh = jnp.maximum(rb - lt, 0.0)
    inter = wh[..., 0] * wh[..., 1]
    union = area1[:, None] + area2[None, :] - inter
    iou = inter / union
    lt_e = jnp.minimum(pred[:, None, :2], gt[None, :, :2])
    rb_e = jnp.maximum(pred[:, None, 2:], gt[None, :, 2:])
    wh_e = jnp.maximum(rb_e - lt_e, 0.0)
    enclose = wh_e[..., 0] * wh_e[..., 1]
    giou = iou - (enclose - union) / enclose
    return -giou * weight


def _make_boxes(key, num, scale=32.0):
    kc, ks = jax.random.split(key)
    centers = jax.random.uniform(kc, (num, 2), minval=0.2, maxval=0.8) * scale
    sizes = jax.random.uniform(ks, (num, 2), minval=0.05, maxval=0.3) * scale
    x1y1 = centers - 0.5 * sizes
    x2y2 = centers + 0.5 * sizes
    return jnp.concatenate([x1y1, x2y2], axis=-1).astype(jnp.float32)


if __name__ == "__main__":
    key = jax.random.PRNGKey(0)
    k_pred, k_gt = jax.random.split(key)

    num_queries, num_gt = 8, 5
    pred_bboxes = _make_boxes(k_pred, num_queries)   # (8, 4) unnormalized x1y1x2y2
    gt_bboxes = _make_boxes(k_gt, num_gt)            # (5, 4) unnormalized x1y1x2y2

    weight = 1.0
    cost = giou_cost(pred_bboxes, gt_bboxes, weight=weight)
    cost = jax.block_until_ready(cost)

    ref = _giou_cost_ref(pred_bboxes, gt_bboxes, weight=weight)
    assert cost.shape == (num_queries, num_gt)
    # Tolerance covers the EUP approx-reciprocal + one NR step.
    assert jnp.allclose(cost, ref, atol=1e-4, rtol=1e-4), (cost, ref)

    # A slightly larger case that exercises tiling / padding / the >=2-step
    # grid split path.
    k2p, k2g = jax.random.split(jax.random.PRNGKey(1))
    pred2 = _make_boxes(k2p, 100)
    gt2 = _make_boxes(k2g, 37)
    cost2 = jax.block_until_ready(giou_cost(pred2, gt2, weight=2.0))
    ref2 = _giou_cost_ref(pred2, gt2, weight=2.0)
    assert cost2.shape == (100, 37)
    assert jnp.allclose(cost2, ref2, atol=1e-4, rtol=1e-4)

    print("KERNEL_OK")
</pallas_src>

<mosaic_0001>
module attributes {stable_mosaic.version = 11 : i64} {
  func.func @_giou_cost_kernel(%arg0: i32, %arg1: i32, %arg2: memref<8x4xf32, #tpu.memory_space<vmem>>, %arg3: memref<4x128xf32, #tpu.memory_space<vmem>>, %arg4: memref<8x128xf32, #tpu.memory_space<vmem>>) attributes {dimension_semantics = [#tpu.dimension_semantics<parallel>, #tpu.dimension_semantics<parallel>], iteration_bounds = array<i64: 1, 1>, scalar_prefetch = 0 : i64, scratch_operands = 0 : i64, tpu.core_type = #tpu.core_type<tc>, window_params = [{transform_indices = @transform_0, window_bounds = array<i64: 8, 4>}, {transform_indices = @transform_1, window_bounds = array<i64: 4, 128>}, {transform_indices = @transform_2, window_bounds = array<i64: 8, 128>}]} {
    %c0 = arith.constant 0 : index
    %c0_0 = arith.constant 0 : index
    %0 = vector.load %arg2[%c0, %c0_0] : memref<8x4xf32, #tpu.memory_space<vmem>>, vector<8x4xf32>
    %c0_1 = arith.constant 0 : index
    %c0_2 = arith.constant 0 : index
    %1 = vector.load %arg3[%c0_1, %c0_2] : memref<4x128xf32, #tpu.memory_space<vmem>>, vector<4x128xf32>
    %2 = vector.extract_strided_slice %0 {offsets = [0, 0], sizes = [8, 1], strides = [1, 1]} : vector<8x4xf32> to vector<8x1xf32>
    %3 = vector.extract_strided_slice %0 {offsets = [0, 1], sizes = [8, 1], strides = [1, 1]} : vector<8x4xf32> to vector<8x1xf32>
    %4 = vector.extract_strided_slice %0 {offsets = [0, 2], sizes = [8, 1], strides = [1, 1]} : vector<8x4xf32> to vector<8x1xf32>
    %5 = vector.extract_strided_slice %0 {offsets = [0, 3], sizes = [8, 1], strides = [1, 1]} : vector<8x4xf32> to vector<8x1xf32>
    %6 = vector.extract_strided_slice %1 {offsets = [0, 0], sizes = [1, 128], strides = [1, 1]} : vector<4x128xf32> to vector<1x128xf32>
    %7 = vector.extract_strided_slice %1 {offsets = [1, 0], sizes = [1, 128], strides = [1, 1]} : vector<4x128xf32> to vector<1x128xf32>
    %8 = vector.extract_strided_slice %1 {offsets = [2, 0], sizes = [1, 128], strides = [1, 1]} : vector<4x128xf32> to vector<1x128xf32>
    %9 = vector.extract_strided_slice %1 {offsets = [3, 0], sizes = [1, 128], strides = [1, 1]} : vector<4x128xf32> to vector<1x128xf32>
    %10 = arith.subf %4, %2 : vector<8x1xf32>
    %11 = arith.subf %5, %3 : vector<8x1xf32>
    %12 = arith.mulf %10, %11 : vector<8x1xf32>
    %13 = arith.subf %8, %6 : vector<1x128xf32>
    %14 = arith.subf %9, %7 : vector<1x128xf32>
    %15 = arith.mulf %13, %14 : vector<1x128xf32>
    %16 = vector.broadcast %4 : vector<8x1xf32> to vector<8x128xf32>
    %17 = vector.broadcast %8 : vector<1x128xf32> to vector<8x128xf32>
    %18 = arith.minimumf %16, %17 : vector<8x128xf32>
    %19 = vector.broadcast %2 : vector<8x1xf32> to vector<8x128xf32>
    %20 = vector.broadcast %6 : vector<1x128xf32> to vector<8x128xf32>
    %21 = arith.maximumf %19, %20 : vector<8x128xf32>
    %22 = arith.subf %18, %21 : vector<8x128xf32>
    %cst = arith.constant 0.000000e+00 : f32
    %23 = vector.broadcast %cst : f32 to vector<8x128xf32>
    %24 = arith.maximumf %22, %23 : vector<8x128xf32>
    %25 = vector.broadcast %5 : vector<8x1xf32> to vector<8x128xf32>
    %26 = vector.broadcast %9 : vector<1x128xf32> to vector<8x128xf32>
    %27 = arith.minimumf %25, %26 : vector<8x128xf32>
    %28 = vector.broadcast %3 : vector<8x1xf32> to vector<8x128xf32>
    %29 = vector.broadcast %7 : vector<1x128xf32> to vector<8x128xf32>
    %30 = arith.maximumf %28, %29 : vector<8x128xf32>
    %31 = arith.subf %27, %30 : vector<8x128xf32>
    %cst_3 = arith.constant 0.000000e+00 : f32
    %32 = vector.broadcast %cst_3 : f32 to vector<8x128xf32>
    %33 = arith.maximumf %31, %32 : vector<8x128xf32>
    %34 = arith.mulf %24, %33 : vector<8x128xf32>
    %35 = vector.broadcast %12 : vector<8x1xf32> to vector<8x128xf32>
    %36 = vector.broadcast %15 : vector<1x128xf32> to vector<8x128xf32>
    %37 = arith.addf %35, %36 : vector<8x128xf32>
    %38 = arith.subf %37, %34 : vector<8x128xf32>
    %39 = vector.broadcast %4 : vector<8x1xf32> to vector<8x128xf32>
    %40 = vector.broadcast %8 : vector<1x128xf32> to vector<8x128xf32>
    %41 = arith.maximumf %39, %40 : vector<8x128xf32>
    %42 = vector.broadcast %2 : vector<8x1xf32> to vector<8x128xf32>
    %43 = vector.broadcast %6 : vector<1x128xf32> to vector<8x128xf32>
    %44 = arith.minimumf %42, %43 : vector<8x128xf32>
    %45 = arith.subf %41, %44 : vector<8x128xf32>
    %46 = vector.broadcast %5 : vector<8x1xf32> to vector<8x128xf32>
    %47 = vector.broadcast %9 : vector<1x128xf32> to vector<8x128xf32>
    %48 = arith.maximumf %46, %47 : vector<8x128xf32>
    %49 = vector.broadcast %3 : vector<8x1xf32> to vector<8x128xf32>
    %50 = vector.broadcast %7 : vector<1x128xf32> to vector<8x128xf32>
    %51 = arith.minimumf %49, %50 : vector<8x128xf32>
    %52 = arith.subf %48, %51 : vector<8x128xf32>
    %53 = arith.mulf %45, %52 : vector<8x128xf32>
    %54 = arith.mulf %34, %53 : vector<8x128xf32>
    %55 = arith.mulf %38, %38 : vector<8x128xf32>
    %56 = arith.addf %54, %55 : vector<8x128xf32>
    %57 = arith.mulf %38, %53 : vector<8x128xf32>
    %58 = tpu.reciprocal %57 {approx = true} : vector<8x128xf32> -> vector<8x128xf32>
    %59 = arith.mulf %57, %58 : vector<8x128xf32>
    %cst_4 = arith.constant 2.000000e+00 : f32
    %60 = vector.broadcast %cst_4 : f32 to vector<8x128xf32>
    %61 = arith.subf %60, %59 : vector<8x128xf32>
    %62 = arith.mulf %58, %61 : vector<8x128xf32>
    %63 = arith.mulf %56, %62 : vector<8x128xf32>
    %cst_5 = arith.constant 1.000000e+00 : f32
    %64 = vector.broadcast %cst_5 : f32 to vector<8x128xf32>
    %65 = arith.subf %64, %63 : vector<8x128xf32>
    %cst_6 = arith.constant 1.000000e+00 : f32
    %66 = vector.broadcast %cst_6 : f32 to vector<8x128xf32>
    %67 = arith.mulf %66, %65 : vector<8x128xf32>
    %c0_7 = arith.constant 0 : index
    %c0_8 = arith.constant 0 : index
    %68 = vector.load %arg4[%c0_7, %c0_8] : memref<8x128xf32, #tpu.memory_space<vmem>>, vector<8x128xf32>
    tpu.vector_store %arg4[%c0_7, %c0_8], %67 {strides = array<i32>} : memref<8x128xf32, #tpu.memory_space<vmem>>, vector<8x128xf32>,
    return
  }
  func.func @transform_0(%arg0: i32, %arg1: i32) -> (i32, i32) {
    %c0_i32 = arith.constant 0 : i32
    %c0_i32_0 = arith.constant 0 : i32
    return %arg0, %c0_i32 : i32, i32
  }
  func.func @transform_1(%arg0: i32, %arg1: i32) -> (i32, i32) {
    %c0_i32 = arith.constant 0 : i32
    %c0_i32_0 = arith.constant 0 : i32
    return %c0_i32, %arg1 : i32, i32
  }
  func.func @transform_2(%arg0: i32, %arg1: i32) -> (i32, i32) {
    %c0_i32 = arith.constant 0 : i32
    return %arg0, %arg1 : i32, i32
  }
}

</mosaic_0001>

<llo_original>
// kernel: tpu_custom_call.1
$region0: #{tpu_custom_call.1}
  #allocation0 [shape = 'u32[]', space=smem, size = 0x4, offset = 0x4, fixed_abs, tag = 'smem constant byte address 0x4 - core index']
  #allocation1 [shape = 'u32[144,128]{1,0:T(1,128)}', space=vmem, size = 0x12000, scoped, tag = 'internal scratch']
  %s0 = inlined_call_operand.vmem [shape: f32[8,4], index: 0, kind: input, shape index: {}]
  %s1 = inlined_call_operand.vmem [shape: f32[4,128], index: 1, kind: input, shape index: {}]
  %s2 = inlined_call_operand.hbm [shape: f32[8,128], index: 2, kind: output, shape index: {}]
  %s3 = sld [smem:[#allocation0]]
  $region18: #{tpu_custom_call.1} parent=0
    _
  %s5 = ssub.s32 1, %s3
  %s6 = scalar_select 0, %s5, %s3
  $region1: #{tpu_custom_call.1} parent=0
    #allocation2 [shape = 'u8[4096]{0}', space=vmem, size = 0x1000, scoped, tag = 'output window, operand 0, single buffered']
    #allocation3 [shape = 's32[1]{0}', space=sflag, size = 0x4, scoped, tag = 'scoped memory for tpu_custom_call.1']
    %7 = vsyncpa [#allocation3], 0
    // Predicated region
    $region2: #{tpu_custom_call.1} parent=1 // pred_check
      _
    $region3: #{tpu_custom_call.1} parent=1 // pred_check_branch
      %9 = sbr.rel (0) target = $region5
    $region4: #{tpu_custom_call.1} parent=1 // pred_region
      _
    $region5: #{tpu_custom_call.1} parent=1 // pred_fallthru
      _
    // Predicated region
    $region6: #{tpu_custom_call.1} parent=1 // pred_check
      _
    $region7: #{tpu_custom_call.1} parent=1 // pred_check_branch
      %11 = sbr.rel (0) target = $region9
    $region8: #{tpu_custom_call.1} parent=1 // pred_region
      _
    $region9: #{tpu_custom_call.1} parent=1 // pred_fallthru
      _
    %v12 = vld [vmem:[%s0] sm:$0xff]
    %v13 = vld [vmem:[%s1] sm:$0xf]
    %15 = vrot.lane.b32.xlu0 %v12, 2
    %v16 = vpop.permute.xlu0 %15
    %v18 = vsub.f32 %v12, %v16
    %20 = vrot.lane.b32.xlu0 %v18, 127
    %v21 = vpop.permute.xlu0 %20
    %v23 = vmul.f32 %v18, %v21
    %v25 = vrot.slane %v13, 6
    %v27 = vsub.f32 %v13, %v25
    %v29 = vrot.slane %v27, 1
    %v31 = vmul.f32 %v27, %v29
    %32 = vset.pattern.permute.xlu0 2
    %33 = vperm.xlu0 %32, %v12
    %v34 = vpop.permute.xlu0 %33
    %v36 = vlaneseq
    %v37 = vshrl.u32 %v36, 7
    %v38 = vsub.s32 2, %v37
    %v39 = vrot.slane %v13, %v38
    %v40 = vmin.f32 %v34, %v39
    %41 = vset.pattern.permute.xlu0 0
    %42 = vperm.xlu0 %41, %v12
    %v43 = vpop.permute.xlu0 %42
    %v45 = vlaneseq
    %v46 = vshrl.u32 %v45, 7
    %v47 = vsub.s32 0, %v46
    %v48 = vrot.slane %v13, %v47
    %v49 = vmax.f32 %v43, %v48
    %v50 = vsub.f32 %v40, %v49
    %v51 = vmax.f32 %v50, 0.0
    %52 = vset.pattern.permute.xlu0 3
    %53 = vperm.xlu0 %52, %v12
    %v54 = vpop.permute.xlu0 %53
    %v56 = vlaneseq
    %v57 = vshrl.u32 %v56, 7
    %v58 = vsub.s32 3, %v57
    %v59 = vrot.slane %v13, %v58
    %v60 = vmin.f32 %v54, %v59
    %61 = vset.pattern.permute.xlu0 1
    %62 = vperm.xlu0 %61, %v12
    %v63 = vpop.permute.xlu0 %62
    %v65 = vlaneseq
    %v66 = vshrl.u32 %v65, 7
    %v67 = vsub.s32 1, %v66
    %v68 = vrot.slane %v13, %v67
    %v69 = vmax.f32 %v63, %v68
    %v70 = vsub.f32 %v60, %v69
    %v71 = vmax.f32 %v70, 0.0
    %v72 = vmul.f32 %v51, %v71
    %74 = vset.pattern.permute.xlu0 2
    %75 = vperm.xlu0 %74, %v23
    %v76 = vpop.permute.xlu0 %75
    %v78 = vlaneseq
    %v79 = vshrl.u32 %v78, 7
    %v80 = vsub.s32 2, %v79
    %v81 = vrot.slane %v31, %v80
    %v82 = vadd.f32 %v76, %v81
    %v83 = vsub.f32 %v82, %v72
    %v84 = vmax.f32 %v34, %v39
    %v85 = vmin.f32 %v43, %v48
    %v86 = vsub.f32 %v84, %v85
    %v87 = vmax.f32 %v54, %v59
    %v88 = vmin.f32 %v63, %v68
    %v89 = vsub.f32 %v87, %v88
    %v90 = vmul.f32 %v86, %v89
    %v91 = vmul.f32 %v72, %v90
    %v92 = vmul.f32 %v83, %v83
    %v93 = vadd.f32 %v91, %v92
    %v94 = vmul.f32 %v83, %v90
    %v95 = vrcp.pop %v94
    %v96 = vmul.f32 %v94, %v95
    %v97 = vsub.f32 2.0, %v96
    %v98 = vmul.f32 %v95, %v97
    %v99 = vmul.f32 %v93, %v98
    %v100 = vsub.f32 1.0, %v99
    %101 = vst [vmem:[#allocation2] sm:$0xff] %v100
    // Predicated region
    $region10: #{tpu_custom_call.1} parent=1 // pred_check
      _
    $region11: #{tpu_custom_call.1} parent=1 // pred_check_branch
      %103 = sbr.rel (0) target = $region13
    $region12: #{tpu_custom_call.1} parent=1 // pred_region
      %s105 = ssub.s32 128, 128
      %106 = vsyncadd [#allocation3], %s105
      %s108 = sshll.u32 [#allocation2], 4
      %s109 = int_to_ptr.vmem [resolvable:$true] %s108
      %111 = dma.vmem_to_hbm [thread:$0]  %s109, 128, %s2, [#allocation3]
    $region13: #{tpu_custom_call.1} parent=1 // pred_fallthru
      _
    // Predicated region
    $region14: #{tpu_custom_call.1} parent=1 // pred_check
      _
    $region15: #{tpu_custom_call.1} parent=1 // pred_check_branch
      %113 = sbr.rel (0) target = $region17
    $region16: #{tpu_custom_call.1} parent=1 // pred_region
      %114 = dma.done [#allocation3], 128
    $region17: #{tpu_custom_call.1} parent=1 // pred_fallthru
      _
    %115 = vsyncpa [#allocation3], 1

</llo_original>
